<compile_context>
chip_gen: v7x
topology: tpu7x:2x2x1
jax: 0.10.0
libtpu: 0.0.40
codegen_flags: <defaults>
</compile_context>

<pallas_src>
import functools

import jax
import jax.numpy as jnp
from jax.experimental import pallas as pl
from jax.experimental.pallas import tpu as pltpu


# ---------------------------------------------------------------------------
# helpers
# ---------------------------------------------------------------------------
def round_to_nearest(input_size, width_mult, num_heads, min_value=1):
    new_width_mult = round(num_heads * width_mult) * 1.0 / num_heads
    return max(min_value, int(new_width_mult * input_size))


def _pad_to(n, m):
    return ((n + m - 1) // m) * m


def _cdiv(a, b):
    return -(-a // b)


# Per-grid-step fixed overhead expressed in "row equivalents" (one step costs roughly
# the same as processing ~16 extra token rows at H~1k).  Used only to pick tile size.
_STEP_OVERHEAD_ROWS = 16


def _choose_tm(batch, tm_max, split_rows=512):
    """Pick the token-tile size.

    Minimizes (total padded rows + per-step overhead) over power-of-two tiles in
    [8, tm_max].  For large batches the tile is capped so the grid has >= 2 steps,
    letting the 'parallel' grid axis shard across both v7x TensorCores.
    """
    bp = _pad_to(batch, 8)
    if bp >= split_rows:                                  # keep >= 2 grid steps
        tm_max = min(tm_max, _pad_to(_cdiv(bp, 2), 8))
    tm_max = max(tm_max, 8)

    best_t, best_cost = 8, None
    t = 8
    while t <= tm_max:
        steps = _cdiv(bp, t)
        cost = steps * t + _STEP_OVERHEAD_ROWS * steps
        if best_cost is None or cost < best_cost or (cost == best_cost and t > best_t):
            best_t, best_cost = t, cost
        t *= 2
    return best_t


# ---------------------------------------------------------------------------
# kernel
# ---------------------------------------------------------------------------
def _cls_head_kernel(x_ref, wd_ref, bd_ref, wo_ref, bo_ref, out_ref):
    # dense: x @ Wd on the MXU with f32 accumulation; operands already in compute dtype.
    h = jnp.dot(x_ref[...], wd_ref[...], preferred_element_type=jnp.float32)
    h = jnp.tanh(h + bd_ref[...])                         # bias + tanh in f32 (EUP)
    # out_proj: h @ Wo (cast h back to the weight dtype for the bf16 MXU path).
    logits = jnp.dot(h.astype(wo_ref.dtype), wo_ref[...],
                     preferred_element_type=jnp.float32)
    out_ref[...] = (logits + bo_ref[...]).astype(out_ref.dtype)


# ---------------------------------------------------------------------------
# one-time weight preparation (do this at model-load time, not per call)
# ---------------------------------------------------------------------------
def prepare_classification_head(dense_w, dense_b, out_w, out_b, *,
                                compute_dtype=jnp.bfloat16,
                                width_mult=1.0, num_heads=12, adaptive_in=False):
    """Pad the head weights to lane-dense multiples of 128 and cast the matmul
    operands to `compute_dtype` (biases stay f32).  Weights are stored (in, out):
    dense_w (H_in, H), out_w (H, num_labels)."""
    if adaptive_in and width_mult != 1.0:
        # AdaptiveLinear(adaptive_dim=[True, False]): static input-width slice.
        h_in = round_to_nearest(dense_w.shape[0], width_mult, num_heads)
        dense_w = dense_w[:h_in, :]

    h_in, h_out = dense_w.shape
    num_labels = out_w.shape[1]
    hp_in, hp_out, lp = _pad_to(h_in, 128), _pad_to(h_out, 128), _pad_to(num_labels, 128)

    wd = jnp.pad(dense_w, ((0, hp_in - h_in), (0, hp_out - h_out))).astype(compute_dtype)
    bd = jnp.pad(dense_b, (0, hp_out - h_out)).reshape(1, hp_out).astype(jnp.float32)
    wo = jnp.pad(out_w, ((0, hp_out - h_out), (0, lp - num_labels))).astype(compute_dtype)
    bo = jnp.pad(out_b, (0, lp - num_labels)).reshape(1, lp).astype(jnp.float32)

    return {"wd": wd, "bd": bd, "wo": wo, "bo": bo,
            "h_in": h_in, "num_labels": num_labels}


# ---------------------------------------------------------------------------
# per-call forward (single jit: slice + cast + pad + pallas_call + un-pad)
# ---------------------------------------------------------------------------
@functools.partial(jax.jit, static_argnames=("h_in", "num_labels", "tm_max"))
def _cls_head_call(features, wd, bd, wo, bo, *, h_in, num_labels, tm_max):
    # CLS token + adaptive-width slice; dropout is identity at inference.
    # TODO(synk): training-mode dropout (stochastic RNG mask) not implemented.
    x = features[:, 0, :h_in]
    batch = x.shape[0]

    hp_in, hp_out = wd.shape
    lp = wo.shape[1]

    tm = _choose_tm(batch, tm_max)
    tp = _pad_to(batch, tm)

    # Cast the activation to the weight (compute) dtype here in the wrapper so the
    # kernel never burns a VPU cast, then zero-pad rows/cols (padding contributes
    # exact zeros through both matmuls and is sliced off below).
    xp = jnp.pad(x.astype(wd.dtype), ((0, tp - batch), (0, hp_in - h_in)))

    w_bytes = jnp.dtype(wd.dtype).itemsize
    # VMEM working set (double-buffered operands + f32 intermediate); used to raise
    # the scoped-VMEM limit for the f32 fallback path on v5e.
    working_set = (2 * tm * hp_in * w_bytes
                   + 2 * hp_in * hp_out * w_bytes
                   + 2 * hp_out * lp * w_bytes
                   + 2 * (hp_out + lp) * 4
                   + 2 * tm * lp * 4
                   + tm * hp_out * 4)
    vmem_limit = int(min(64 * 1024 * 1024, max(32 * 1024 * 1024, 2 * working_set)))

    cost = pl.CostEstimate(
        flops=2 * tp * hp_in * hp_out + 2 * tp * hp_out * lp,
        transcendentals=tp * hp_out,
        bytes_accessed=(tp * hp_in * w_bytes
                        + hp_in * hp_out * w_bytes
                        + hp_out * lp * w_bytes
                        + (hp_out + lp) * 4
                        + tp * lp * 4),
    )

    out = pl.pallas_call(
        _cls_head_kernel,
        out_shape=jax.ShapeDtypeStruct((tp, lp), jnp.float32),
        grid=(tp // tm,),
        in_specs=[
            pl.BlockSpec((tm, hp_in), lambda i: (i, 0)),      # CLS feature tile
            pl.BlockSpec((hp_in, hp_out), lambda i: (0, 0)),  # dense weight (resident)
            pl.BlockSpec((1, hp_out), lambda i: (0, 0)),      # dense bias (f32)
            pl.BlockSpec((hp_out, lp), lambda i: (0, 0)),     # out_proj weight (resident)
            pl.BlockSpec((1, lp), lambda i: (0, 0)),          # out_proj bias (f32)
        ],
        out_specs=pl.BlockSpec((tm, lp), lambda i: (i, 0)),
        compiler_params=pltpu.CompilerParams(
            dimension_semantics=("parallel",),                # token axis -> both v7x TCs
            vmem_limit_bytes=vmem_limit),
        cost_estimate=cost,
    )(xp, wd, bd, wo, bo)

    return out[:batch, :num_labels]


def roberta_classification_head(features, prepared, *, tm_max=256):
    """features: (B, S, H).  `prepared` comes from prepare_classification_head().
    Returns logits (B, num_labels) in float32."""
    return _cls_head_call(features, prepared["wd"], prepared["bd"],
                          prepared["wo"], prepared["bo"],
                          h_in=prepared["h_in"],
                          num_labels=prepared["num_labels"],
                          tm_max=tm_max)


# ---------------------------------------------------------------------------
# reference + demo
# ---------------------------------------------------------------------------
def _reference(features, dense_w, dense_b, out_w, out_b):
    x = features[:, 0, :]
    h = jnp.tanh(x @ dense_w + dense_b)
    return h @ out_w + out_b


if __name__ == "__main__":
    B, S, H, L = 2, 8, 32, 3
    key = jax.random.PRNGKey(0)
    k_feat, k_dw, k_db, k_ow, k_ob, k_feat2 = jax.random.split(key, 6)

    features = jax.random.normal(k_feat, (B, S, H), dtype=jnp.float32)
    dense_w = jax.random.normal(k_dw, (H, H), dtype=jnp.float32) * 0.02
    dense_b = jax.random.normal(k_db, (H,), dtype=jnp.float32) * 0.02
    out_w = jax.random.normal(k_ow, (H, L), dtype=jnp.float32) * 0.02
    out_b = jax.random.normal(k_ob, (L,), dtype=jnp.float32) * 0.02

    ref = _reference(features, dense_w, dense_b, out_w, out_b)

    # Default perf path: bf16 operands, f32 accumulation (looser tolerance).
    params_bf16 = prepare_classification_head(dense_w, dense_b, out_w, out_b)
    out_bf16 = jax.block_until_ready(roberta_classification_head(features, params_bf16))
    assert out_bf16.shape == (B, L)
    assert jnp.allclose(out_bf16, ref, atol=2e-2, rtol=2e-2), "bf16 kernel mismatch"

    # Full-f32 path (tight tolerance).
    params_f32 = prepare_classification_head(dense_w, dense_b, out_w, out_b,
                                             compute_dtype=jnp.float32)
    out_f32 = jax.block_until_ready(roberta_classification_head(features, params_f32))
    assert out_f32.shape == (B, L)
    assert jnp.allclose(out_f32, ref, atol=1e-3, rtol=1e-3), "f32 kernel mismatch"

    # Multi-step grid + padded-rows path (force a small tile so the grid has >1 step).
    B2 = 17
    features2 = jax.random.normal(k_feat2, (B2, S, H), dtype=jnp.float32)
    ref2 = _reference(features2, dense_w, dense_b, out_w, out_b)
    out2 = jax.block_until_ready(
        roberta_classification_head(features2, params_f32, tm_max=8))
    assert out2.shape == (B2, L)
    assert jnp.allclose(out2, ref2, atol=1e-3, rtol=1e-3), "tiled-grid kernel mismatch"

    print("KERNEL_OK")
</pallas_src>

<mosaic_0001>
module attributes {stable_mosaic.version = 11 : i64} {
  func.func @_cls_head_kernel(%arg0: i32, %arg1: memref<8x128xbf16, #tpu.memory_space<vmem>>, %arg2: memref<128x128xbf16, #tpu.memory_space<vmem>>, %arg3: memref<1x128xf32, #tpu.memory_space<vmem>>, %arg4: memref<128x128xbf16, #tpu.memory_space<vmem>>, %arg5: memref<1x128xf32, #tpu.memory_space<vmem>>, %arg6: memref<8x128xf32, #tpu.memory_space<vmem>>) attributes {dimension_semantics = [#tpu.dimension_semantics<parallel>], iteration_bounds = array<i64: 1>, scalar_prefetch = 0 : i64, scratch_operands = 0 : i64, tpu.core_type = #tpu.core_type<tc>, window_params = [{transform_indices = @transform_0, window_bounds = array<i64: 8, 128>}, {pipeline_mode = #tpu.pipeline_mode<synchronous>, transform_indices = @transform_1, window_bounds = array<i64: 128, 128>}, {pipeline_mode = #tpu.pipeline_mode<synchronous>, transform_indices = @transform_2, window_bounds = array<i64: 1, 128>}, {pipeline_mode = #tpu.pipeline_mode<synchronous>, transform_indices = @transform_3, window_bounds = array<i64: 128, 128>}, {pipeline_mode = #tpu.pipeline_mode<synchronous>, transform_indices = @transform_4, window_bounds = array<i64: 1, 128>}, {transform_indices = @transform_5, window_bounds = array<i64: 8, 128>}]} {
    %c0 = arith.constant 0 : index
    %c0_0 = arith.constant 0 : index
    %0 = vector.load %arg1[%c0, %c0_0] : memref<8x128xbf16, #tpu.memory_space<vmem>>, vector<8x128xbf16>
    %c0_1 = arith.constant 0 : index
    %c0_2 = arith.constant 0 : index
    %1 = vector.load %arg2[%c0_1, %c0_2] : memref<128x128xbf16, #tpu.memory_space<vmem>>, vector<128x128xbf16>
    %cst = arith.constant dense<0.000000e+00> : vector<8x128xf32>
    %2 = tpu.matmul %0, %1, %cst {dimension_numbers = #tpu.dot_dimension_numbers<[1], [0], [0], [1], [0, 0, 1, 1], [], []>} : vector<8x128xbf16>, vector<128x128xbf16>, vector<8x128xf32> -> vector<8x128xf32>
    %c0_3 = arith.constant 0 : index
    %c0_4 = arith.constant 0 : index
    %3 = vector.load %arg3[%c0_3, %c0_4] : memref<1x128xf32, #tpu.memory_space<vmem>>, vector<1x128xf32>
    %4 = vector.broadcast %3 : vector<1x128xf32> to vector<8x128xf32>
    %5 = arith.addf %2, %4 : vector<8x128xf32>
    %6 = math.tanh %5 : vector<8x128xf32>
    %7 = arith.truncf %6 : vector<8x128xf32> to vector<8x128xbf16>
    %c0_5 = arith.constant 0 : index
    %c0_6 = arith.constant 0 : index
    %8 = vector.load %arg4[%c0_5, %c0_6] : memref<128x128xbf16, #tpu.memory_space<vmem>>, vector<128x128xbf16>
    %cst_7 = arith.constant dense<0.000000e+00> : vector<8x128xf32>
    %9 = tpu.matmul %7, %8, %cst_7 {dimension_numbers = #tpu.dot_dimension_numbers<[1], [0], [0], [1], [0, 0, 1, 1], [], []>} : vector<8x128xbf16>, vector<128x128xbf16>, vector<8x128xf32> -> vector<8x128xf32>
    %c0_8 = arith.constant 0 : index
    %c0_9 = arith.constant 0 : index
    %10 = vector.load %arg5[%c0_8, %c0_9] : memref<1x128xf32, #tpu.memory_space<vmem>>, vector<1x128xf32>
    %11 = vector.broadcast %10 : vector<1x128xf32> to vector<8x128xf32>
    %12 = arith.addf %9, %11 : vector<8x128xf32>
    %c0_10 = arith.constant 0 : index
    %c0_11 = arith.constant 0 : index
    %13 = vector.load %arg6[%c0_10, %c0_11] : memref<8x128xf32, #tpu.memory_space<vmem>>, vector<8x128xf32>
    tpu.vector_store %arg6[%c0_10, %c0_11], %12 {strides = array<i32>} : memref<8x128xf32, #tpu.memory_space<vmem>>, vector<8x128xf32>,
    return
  }
  func.func @transform_0(%arg0: i32) -> (i32, i32) {
    %c0_i32 = arith.constant 0 : i32
    %c0_i32_0 = arith.constant 0 : i32
    return %arg0, %c0_i32 : i32, i32
  }
  func.func @transform_1(%arg0: i32) -> (i32, i32) {
    %c0_i32 = arith.constant 0 : i32
    %c0_i32_0 = arith.constant 0 : i32
    %c0_i32_1 = arith.constant 0 : i32
    return %c0_i32, %c0_i32_0 : i32, i32
  }
  func.func @transform_2(%arg0: i32) -> (i32, i32) {
    %c0_i32 = arith.constant 0 : i32
    %c0_i32_0 = arith.constant 0 : i32
    %c0_i32_1 = arith.constant 0 : i32
    return %c0_i32, %c0_i32_0 : i32, i32
  }
  func.func @transform_3(%arg0: i32) -> (i32, i32) {
    %c0_i32 = arith.constant 0 : i32
    %c0_i32_0 = arith.constant 0 : i32
    %c0_i32_1 = arith.constant 0 : i32
    return %c0_i32, %c0_i32_0 : i32, i32
  }
  func.func @transform_4(%arg0: i32) -> (i32, i32) {
    %c0_i32 = arith.constant 0 : i32
    %c0_i32_0 = arith.constant 0 : i32
    %c0_i32_1 = arith.constant 0 : i32
    return %c0_i32, %c0_i32_0 : i32, i32
  }
  func.func @transform_5(%arg0: i32) -> (i32, i32) {
    %c0_i32 = arith.constant 0 : i32
    %c0_i32_0 = arith.constant 0 : i32
    return %arg0, %c0_i32 : i32, i32
  }
}

</mosaic_0001>

<llo_original>
// kernel: _cls_head_call.1
$region0: #{_cls_head_call.1}
  #allocation0 [shape = 'u32[]', space=smem, size = 0x4, offset = 0x4, fixed_abs, tag = 'smem constant byte address 0x4 - core index']
  #allocation1 [shape = 'u32[144,128]{1,0:T(1,128)}', space=vmem, size = 0x12000, scoped, tag = 'internal scratch']
  %s0 = inlined_call_operand.vmem [shape: bf16[8,128], index: 0, kind: input, shape index: {}]
  %s1 = inlined_call_operand.hbm [shape: bf16[128,128], index: 1, kind: input, shape index: {}]
  %s2 = inlined_call_operand.vmem [shape: f32[1,128], index: 2, kind: input, shape index: {}]
  %s3 = inlined_call_operand.hbm [shape: bf16[128,128], index: 3, kind: input, shape index: {}]
  %s4 = inlined_call_operand.vmem [shape: f32[1,128], index: 4, kind: input, shape index: {}]
  %s5 = inlined_call_operand.vmem [shape: f32[8,128], index: 5, kind: output, shape index: {}]
  %s6 = sld [smem:[#allocation0]]
  $region38: #{_cls_head_call.1} parent=0
    _
  %s8 = ssub.s32 1, %s6
  %s9 = scalar_select 0, %s8, %s6
  $region1: #{_cls_head_call.1} parent=0
    #allocation2 [shape = 'u8[32768]{0}', space=vmem, size = 0x8000, scoped, tag = 'input window, operand 1, single buffered']
    #allocation3 [shape = 's32[1]{0}', space=sflag, size = 0x4, scoped, tag = 'scoped memory for _cls_head_call.1']
    #allocation4 [shape = 'u8[32768]{0}', space=vmem, size = 0x8000, scoped, tag = 'input window, operand 3, single buffered']
    #allocation5 [shape = 's32[1]{0}', space=sflag, size = 0x4, scoped, tag = 'scoped memory for _cls_head_call.1']
    %10 = vsyncpa [#allocation3], 0
    %11 = vsyncpa [#allocation5], 0
    // Predicated region
    $region2: #{_cls_head_call.1} parent=1 // pred_check
      _
    $region3: #{_cls_head_call.1} parent=1 // pred_check_branch
      %13 = sbr.rel (0) target = $region5
    $region4: #{_cls_head_call.1} parent=1 // pred_region
      _
    $region5: #{_cls_head_call.1} parent=1 // pred_fallthru
      _
    // Predicated region
    $region6: #{_cls_head_call.1} parent=1 // pred_check
      _
    $region7: #{_cls_head_call.1} parent=1 // pred_check_branch
      %15 = sbr.rel (0) target = $region9
    $region8: #{_cls_head_call.1} parent=1 // pred_region
      %s17 = ssub.s32 1024, 1024
      %18 = vsyncadd [#allocation3], %s17
      %s19 = sshll.u32 [#allocation2], 4
      %s20 = int_to_ptr.vmem [resolvable:$true] %s19
      %25 = dma.hbm_to_vmem [thread:$0]  %s1, 1024, %s20, [#allocation3], 64, 64, 4
    $region9: #{_cls_head_call.1} parent=1 // pred_fallthru
      _
    // Predicated region
    $region10: #{_cls_head_call.1} parent=1 // pred_check
      _
    $region11: #{_cls_head_call.1} parent=1 // pred_check_branch
      %27 = sbr.rel (0) target = $region13
    $region12: #{_cls_head_call.1} parent=1 // pred_region
      _
    $region13: #{_cls_head_call.1} parent=1 // pred_fallthru
      _
    // Predicated region
    $region14: #{_cls_head_call.1} parent=1 // pred_check
      _
    $region15: #{_cls_head_call.1} parent=1 // pred_check_branch
      %29 = sbr.rel (0) target = $region17
    $region16: #{_cls_head_call.1} parent=1 // pred_region
      %s31 = ssub.s32 1024, 1024
      %32 = vsyncadd [#allocation5], %s31
      %s33 = sshll.u32 [#allocation4], 4
      %s34 = int_to_ptr.vmem [resolvable:$true] %s33
      %39 = dma.hbm_to_vmem [thread:$0]  %s3, 1024, %s34, [#allocation5], 64, 64, 4
    $region17: #{_cls_head_call.1} parent=1 // pred_fallthru
      _
    // Predicated region
    $region18: #{_cls_head_call.1} parent=1 // pred_check
      _
    $region19: #{_cls_head_call.1} parent=1 // pred_check_branch
      %41 = sbr.rel (0) target = $region21
    $region20: #{_cls_head_call.1} parent=1 // pred_region
      _
    $region21: #{_cls_head_call.1} parent=1 // pred_fallthru
      _
    // Predicated region
    $region22: #{_cls_head_call.1} parent=1 // pred_check
      _
    $region23: #{_cls_head_call.1} parent=1 // pred_check_branch
      %43 = sbr.rel (0) target = $region25
    $region24: #{_cls_head_call.1} parent=1 // pred_region
      %44 = dma.done [#allocation3], 1024
    $region25: #{_cls_head_call.1} parent=1 // pred_fallthru
      _
    // Predicated region
    $region26: #{_cls_head_call.1} parent=1 // pred_check
      _
    $region27: #{_cls_head_call.1} parent=1 // pred_check_branch
      %46 = sbr.rel (0) target = $region29
    $region28: #{_cls_head_call.1} parent=1 // pred_region
      %47 = dma.done [#allocation5], 1024
    $region29: #{_cls_head_call.1} parent=1 // pred_fallthru
      _
    %v49 = vld [vmem:[%s0] sm:$0xf]
    %v50 = vld [vmem:[#allocation2] sm:$0xf]
    %v51 = vld [vmem:[#allocation2 + $0x4] sm:$0xf]
    %v52 = vld [vmem:[#allocation2 + $0x8] sm:$0xf]
    %v53 = vld [vmem:[#allocation2 + $0xc] sm:$0xf]
    %v54 = vld [vmem:[#allocation2 + $0x10] sm:$0xf]
    %v55 = vld [vmem:[#allocation2 + $0x14] sm:$0xf]
    %v56 = vld [vmem:[#allocation2 + $0x18] sm:$0xf]
    %v57 = vld [vmem:[#allocation2 + $0x1c] sm:$0xf]
    %v58 = vld [vmem:[#allocation2 + $0x20] sm:$0xf]
    %v59 = vld [vmem:[#allocation2 + $0x24] sm:$0xf]
    %v60 = vld [vmem:[#allocation2 + $0x28] sm:$0xf]
    %v61 = vld [vmem:[#allocation2 + $0x2c] sm:$0xf]
    %v62 = vld [vmem:[#allocation2 + $0x30] sm:$0xf]
    %v63 = vld [vmem:[#allocation2 + $0x34] sm:$0xf]
    %v64 = vld [vmem:[#allocation2 + $0x38] sm:$0xf]
    %v65 = vld [vmem:[#allocation2 + $0x3c] sm:$0xf]
    %v66 = vld [vmem:[%s2] sm:$0x1]
    %v68 = vlaneseq
    %v69 = vshrl.u32 %v68, 7
    %v70 = vsub.s32 0, %v69
    %v71 = vrot.slane %v66, %v70
    %v89 = vunpack.c.l.b16 %v50
    %v90 = vunpack.c.l.b16 %v51
    %v91 = vunpack.c.l.b16 %v52
    %v92 = vunpack.c.l.b16 %v53
    %v93 = vunpack.c.l.b16 %v54
    %v94 = vunpack.c.l.b16 %v55
    %v95 = vunpack.c.l.b16 %v56
    %v96 = vunpack.c.l.b16 %v57
    %v97 = vunpack.c.l.b16 %v58
    %v98 = vunpack.c.l.b16 %v59
    %v99 = vunpack.c.l.b16 %v60
    %v100 = vunpack.c.l.b16 %v61
    %v101 = vunpack.c.l.b16 %v62
    %v102 = vunpack.c.l.b16 %v63
    %v103 = vunpack.c.l.b16 %v64
    %v104 = vunpack.c.l.b16 %v65
    %v105 = vpack.c.b16 %v90, %v89
    %v106 = vpack.c.b16 %v92, %v91
    %v107 = vpack.c.b16 %v94, %v93
    %v108 = vpack.c.b16 %v96, %v95
    %v109 = vpack.c.b16 %v98, %v97
    %v110 = vpack.c.b16 %v100, %v99
    %v111 = vpack.c.b16 %v102, %v101
    %v112 = vpack.c.b16 %v104, %v103
    %121 = vmatprep.subr.bf16.mxu0 0
    %122 = vmatpush1.bf16.msra.mxu0 %v105
    %123 = vmatprep.subr.bf16.mxu0 0
    %124 = vmatpush1.bf16.msra.mxu0 %v106
    %125 = vmatprep.subr.bf16.mxu0 0
    %126 = vmatpush1.bf16.msra.mxu0 %v107
    %127 = vmatprep.subr.bf16.mxu0 0
    %128 = vmatpush1.bf16.msra.mxu0 %v108
    %129 = vmatprep.subr.bf16.mxu0 0
    %130 = vmatpush1.bf16.msra.mxu0 %v109
    %131 = vmatprep.subr.bf16.mxu0 0
    %132 = vmatpush1.bf16.msra.mxu0 %v110
    %133 = vmatprep.subr.bf16.mxu0 0
    %134 = vmatpush1.bf16.msra.mxu0 %v111
    %135 = vmatprep.subr.bf16.mxu0 0
    %136 = vmatpush1.bf16.msra.mxu0 %v112
    %137 = vmatprep.subr.bf16.mxu0 0
    %138 = vmatpush1.bf16.msra.mxu0 0
    %139 = vmatprep.subr.bf16.mxu0 0
    %140 = vmatpush1.bf16.msra.mxu0 0
    %141 = vmatprep.subr.bf16.mxu0 0
    %142 = vmatpush1.bf16.msra.mxu0 0
    %143 = vmatprep.subr.bf16.mxu0 0
    %144 = vmatpush1.bf16.msra.mxu0 0
    %145 = vmatprep.subr.bf16.mxu0 0
    %146 = vmatpush1.bf16.msra.mxu0 0
    %147 = vmatprep.subr.bf16.mxu0 0
    %148 = vmatpush1.bf16.msra.mxu0 0
    %149 = vmatprep.subr.bf16.mxu0 0
    %150 = vmatpush1.bf16.msra.mxu0 0
    %151 = vmatprep.subr.bf16.mxu0 0
    %152 = vmatpush1.bf16.msra.mxu0 0
    %153 = vmatprep.mubr.bf16.mxu0 0
    %154 = vmatmul.mubr.bf16.gmra.mrb[0].mxu0 %v49
    %v155 = vpop.f32.mrb[0].mxu0
    %v156 = vadd.f32 %v71, %v155
    %v157 = vpop.f32.mrb[0].mxu0
    %v158 = vpop.f32.mrb[0].mxu0
    %v159 = vpop.f32.mrb[0].mxu0
    %160 = vdwg.mxu0
    %v161 = vtanh.pop %v156
    %v162 = vpack.c.bf16 %v161, %v161
    %v163 = vld [vmem:[#allocation4] sm:$0xf]
    %v164 = vld [vmem:[#allocation4 + $0x4] sm:$0xf]
    %v165 = vld [vmem:[#allocation4 + $0x8] sm:$0xf]
    %v166 = vld [vmem:[#allocation4 + $0xc] sm:$0xf]
    %v167 = vld [vmem:[#allocation4 + $0x10] sm:$0xf]
    %v168 = vld [vmem:[#allocation4 + $0x14] sm:$0xf]
    %v169 = vld [vmem:[#allocation4 + $0x18] sm:$0xf]
    %v170 = vld [vmem:[#allocation4 + $0x1c] sm:$0xf]
    %v171 = vld [vmem:[#allocation4 + $0x20] sm:$0xf]
    %v172 = vld [vmem:[#allocation4 + $0x24] sm:$0xf]
    %v173 = vld [vmem:[#allocation4 + $0x28] sm:$0xf]
    %v174 = vld [vmem:[#allocation4 + $0x2c] sm:$0xf]
    %v175 = vld [vmem:[#allocation4 + $0x30] sm:$0xf]
    %v176 = vld [vmem:[#allocation4 + $0x34] sm:$0xf]
    %v177 = vld [vmem:[#allocation4 + $0x38] sm:$0xf]
    %v178 = vld [vmem:[#allocation4 + $0x3c] sm:$0xf]
    %v179 = vld [vmem:[%s4] sm:$0x1]
    %v181 = vlaneseq
    %v182 = vshrl.u32 %v181, 7
    %v183 = vsub.s32 0, %v182
    %v184 = vrot.slane %v179, %v183
    %v202 = vunpack.c.l.b16 %v163
    %v203 = vunpack.c.l.b16 %v164
    %v204 = vunpack.c.l.b16 %v165
    %v205 = vunpack.c.l.b16 %v166
    %v206 = vunpack.c.l.b16 %v167
    %v207 = vunpack.c.l.b16 %v168
    %v208 = vunpack.c.l.b16 %v169
    %v209 = vunpack.c.l.b16 %v170
    %v210 = vunpack.c.l.b16 %v171
    %v211 = vunpack.c.l.b16 %v172
    %v212 = vunpack.c.l.b16 %v173
    %v213 = vunpack.c.l.b16 %v174
    %v214 = vunpack.c.l.b16 %v175
    %v215 = vunpack.c.l.b16 %v176
    %v216 = vunpack.c.l.b16 %v177
    %v217 = vunpack.c.l.b16 %v178
    %v218 = vpack.c.b16 %v203, %v202
    %v219 = vpack.c.b16 %v205, %v204
    %v220 = vpack.c.b16 %v207, %v206
    %v221 = vpack.c.b16 %v209, %v208
    %v222 = vpack.c.b16 %v211, %v210
    %v223 = vpack.c.b16 %v213, %v212
    %v224 = vpack.c.b16 %v215, %v214
    %v225 = vpack.c.b16 %v217, %v216
    %234 = vmatprep.subr.bf16.mxu0 0
    %235 = vmatpush1.bf16.msra.mxu0 %v218
    %236 = vmatprep.subr.bf16.mxu0 0
    %237 = vmatpush1.bf16.msra.mxu0 %v219
    %238 = vmatprep.subr.bf16.mxu0 0
    %239 = vmatpush1.bf16.msra.mxu0 %v220
    %240 = vmatprep.subr.bf16.mxu0 0
    %241 = vmatpush1.bf16.msra.mxu0 %v221
    %242 = vmatprep.subr.bf16.mxu0 0
    %243 = vmatpush1.bf16.msra.mxu0 %v222
    %244 = vmatprep.subr.bf16.mxu0 0
    %245 = vmatpush1.bf16.msra.mxu0 %v223
    %246 = vmatprep.subr.bf16.mxu0 0
    %247 = vmatpush1.bf16.msra.mxu0 %v224
    %248 = vmatprep.subr.bf16.mxu0 0
    %249 = vmatpush1.bf16.msra.mxu0 %v225
    %250 = vmatprep.subr.bf16.mxu0 0
    %251 = vmatpush1.bf16.msra.mxu0 0
    %252 = vmatprep.subr.bf16.mxu0 0
    %253 = vmatpush1.bf16.msra.mxu0 0
    %254 = vmatprep.subr.bf16.mxu0 0
    %255 = vmatpush1.bf16.msra.mxu0 0
    %256 = vmatprep.subr.bf16.mxu0 0
    %257 = vmatpush1.bf16.msra.mxu0 0
    %258 = vmatprep.subr.bf16.mxu0 0
    %259 = vmatpush1.bf16.msra.mxu0 0
    %260 = vmatprep.subr.bf16.mxu0 0
    %261 = vmatpush1.bf16.msra.mxu0 0
    %262 = vmatprep.subr.bf16.mxu0 0
    %263 = vmatpush1.bf16.msra.mxu0 0
    %264 = vmatprep.subr.bf16.mxu0 0
    %265 = vmatpush1.bf16.msra.mxu0 0
    %266 = vmatprep.mubr.bf16.mxu0 0
    %267 = vmatmul.mubr.bf16.gmra.mrb[0].mxu0 %v162
    %v268 = vpop.f32.mrb[0].mxu0
    %v269 = vadd.f32 %v184, %v268
    %v270 = vpop.f32.mrb[0].mxu0
    %v271 = vpop.f32.mrb[0].mxu0
    %v272 = vpop.f32.mrb[0].mxu0
    %273 = vdwg.mxu0
    %274 = vst [vmem:[%s5] sm:$0xff] %v269
    // Predicated region
    $region30: #{_cls_head_call.1} parent=1 // pred_check
      _
    $region31: #{_cls_head_call.1} parent=1 // pred_check_branch
      %276 = sbr.rel (0) target = $region33
    $region32: #{_cls_head_call.1} parent=1 // pred_region
      _
    $region33: #{_cls_head_call.1} parent=1 // pred_fallthru
      _
    // Predicated region
    $region34: #{_cls_head_call.1} parent=1 // pred_check
      _
    $region35: #{_cls_head_call.1} parent=1 // pred_check_branch
      %278 = sbr.rel (0) target = $region37
    $region36: #{_cls_head_call.1} parent=1 // pred_region
      _
    $region37: #{_cls_head_call.1} parent=1 // pred_fallthru
      _
    %279 = vsyncpa [#allocation3], 1
    %280 = vsyncpa [#allocation5], 1

</llo_original>
